<compile_context>
chip_gen: v6e
topology: v6e:2x2x1
jax: 0.10.0
libtpu: 0.0.40
codegen_flags: <defaults>
</compile_context>

<pallas_src>
import functools

import jax
import jax.numpy as jnp
from jax.experimental import pallas as pl
from jax.experimental.pallas import tpu as pltpu

# ---- module-consistent problem sizes ---------------------------------------
INPUT_DIM = 4      # input_shapes['input_dim']   (Conv1d channels)
INPUT_LEN = 16     # input_shapes['input_len']   (sequence length)
ENCODE_DIM = 2     # encode_dim
BATCH = 2          # NOTE: throughput scales ~free up to B*L >= 128 if the
                   # serving path can batch more examples per call.


# ---------------------------------------------------------------------------
# host-side parameter packing (one slab, static 8-aligned layout)
# ---------------------------------------------------------------------------
def _stack_taps(w):
    # (Cout, Cin, 3) -> (Cout, 3*Cin), taps ordered [k=0 | k=1 | k=2]
    return jnp.concatenate([w[:, :, 0], w[:, :, 1], w[:, :, 2]], axis=1)


def pack_params(p):
    """Pack every weight/bias (+ conv boundary masks) into a single f32 slab.

    Returns (slab, layout) where layout[name] = (row0, nrows, ncols) — static
    Python ints the kernel uses to slice the slab ref.  Every row0 is a
    multiple of 8 so each slice starts on a sublane-tile boundary.
    """
    L, E, B = INPUT_LEN, ENCODE_DIM, BATCH
    BL = B * L
    lane = jnp.arange(BL)
    # keep-masks that zero the first / last position of every batch block
    keep_first = (lane % L != 0).astype(jnp.float32)[None, :]       # for x[:, m-1]
    keep_last = (lane % L != L - 1).astype(jnp.float32)[None, :]    # for x[:, m+1]
    col = lambda b: b.reshape(-1, 1)

    entries = [
        ('keep_first', keep_first),
        ('keep_last', keep_last),
        # encoder
        ('ew1', p['ew1'][:, :, 0]), ('eb1', col(p['eb1'])),
        ('ew2', p['ew2'][:, :, 0]), ('eb2', col(p['eb2'])),
        ('ew3', _stack_taps(p['ew3'])), ('eb3', col(p['eb3'])),
        # Linear: W.T laid out as (4L, E*L); row block c*L..(c+1)*L is channel c
        ('w_lin', p['ew4'].T),
        ('eb4', p['eb4'].reshape(1, -1)),                            # (1, E*L)
        # decoder
        ('dw1', _stack_taps(p['dw1'])), ('db1', col(p['db1'])),
        ('dw2', _stack_taps(p['dw2'])), ('db2', col(p['db2'])),
        ('dw3', p['dw3'][:, :, 0]), ('db3', col(p['db3'])),
        ('dw4', p['dw4'][:, :, 0]), ('db4', col(p['db4'])),
    ]

    width = max(int(arr.shape[1]) for _, arr in entries)
    layout, row = {}, 0
    for name, arr in entries:
        r, c = int(arr.shape[0]), int(arr.shape[1])
        layout[name] = (row, r, c)
        row += ((r + 7) // 8) * 8          # 8-align the NEXT entry's start row
    nrows = ((row + 7) // 8) * 8
    slab = jnp.zeros((nrows, width), jnp.float32)
    for name, arr in entries:
        r0, r, c = layout[name]
        slab = slab.at[r0:r0 + r, 0:c].set(arr.astype(jnp.float32))
    return slab, layout


# ---------------------------------------------------------------------------
# the fused kernel — activations live as (channels, B*L) in vregs throughout
# ---------------------------------------------------------------------------
def _autoencoder_kernel(x_ref, slab_ref, o_ref, *, layout, B, L, E):
    BL = B * L

    def get(name):
        r0, r, c = layout[name]
        return slab_ref[r0:r0 + r, 0:c]

    keep_first = get('keep_first')                       # (1, BL)
    keep_last = get('keep_last')                         # (1, BL)
    relu = lambda v: jnp.maximum(v, 0.0)

    def conv1(x, w, b):                                  # kernel_size=1: one channel matmul
        return jnp.dot(w, x, preferred_element_type=jnp.float32) + b

    def conv3(x, w_stk, b):                              # kernel_size=3, padding='same'
        # shifted copies: static lane roll + batch-boundary keep mask
        x_m1 = jnp.roll(x, 1, axis=1) * keep_first       # x[:, m-1], 0 at block start
        x_p1 = jnp.roll(x, -1, axis=1) * keep_last       # x[:, m+1], 0 at block end
        # fuse all 3 taps into ONE matmul: (Cout, 3*Cin) @ (3*Cin, BL)
        x3 = jnp.concatenate([x_m1, x, x_p1], axis=0)
        return jnp.dot(w_stk, x3, preferred_element_type=jnp.float32) + b

    xf = x_ref[...]                                      # (D, BL), folded by wrapper

    # ---------------- encoder ----------------
    h = relu(conv1(xf, get('ew1'), get('eb1')))          # (16, BL)
    h = relu(conv1(h, get('ew2'), get('eb2')))           # (8,  BL)
    h = relu(conv3(h, get('ew3'), get('eb3')))           # (4,  BL)

    # ---------------- linear (torch .view(-1, 4L) @ W.T + b), ONE matmul ----
    # h2[b, c*L+l] = h[c, b*L+l]  (== torch's flattened activation)
    h2 = jnp.concatenate(
        [jnp.concatenate([h[c:c + 1, b * L:(b + 1) * L] for c in range(4)], axis=1)
         for b in range(B)], axis=0)                     # (B, 4L)
    z2 = jnp.dot(h2, get('w_lin'), preferred_element_type=jnp.float32) + get('eb4')  # (B, E*L)

    # unflatten (torch .view(-1, E, L)) to decoder layout (E, BL):
    # z[e, b*L+m] = z2[b, e*L+m]  — static lane slices + sublane concat.
    z = jnp.concatenate(
        [jnp.concatenate([z2[b:b + 1, e * L:(e + 1) * L] for b in range(B)], axis=1)
         for e in range(E)], axis=0)                     # (E, BL)

    # ---------------- decoder ----------------
    d = relu(conv3(z, get('dw1'), get('db1')))           # (4,  BL)
    d = relu(conv3(d, get('dw2'), get('db2')))           # (8,  BL)
    d = relu(conv1(d, get('dw3'), get('db3')))           # (16, BL)
    y = conv1(d, get('dw4'), get('db4'))                 # (D,  BL)

    o_ref[...] = y.astype(o_ref.dtype)                   # one dense store


def make_forward(layout):
    kernel = functools.partial(_autoencoder_kernel, layout=layout,
                               B=BATCH, L=INPUT_LEN, E=ENCODE_DIM)

    @jax.jit
    def forward(x, slab):
        B, D, L = x.shape
        # fold batch onto the lane axis OUTSIDE the kernel (layout plumbing)
        xf = x.transpose(1, 0, 2).reshape(D, B * L)
        yf = pl.pallas_call(
            kernel,
            out_shape=jax.ShapeDtypeStruct((D, B * L), jnp.float32),
            in_specs=[pl.BlockSpec(memory_space=pltpu.MemorySpace.VMEM),
                      pl.BlockSpec(memory_space=pltpu.MemorySpace.VMEM)],
            out_specs=pl.BlockSpec(memory_space=pltpu.MemorySpace.VMEM),
        )(xf, slab)
        return yf.reshape(D, B, L).transpose(1, 0, 2)     # back to (B, D, L)

    return forward


# ---------------------------------------------------------------------------
# deterministic parameters (torch Conv1d weight shapes: (out, in, k))
# ---------------------------------------------------------------------------
def init_params(key):
    ks = jax.random.split(key, 16)
    rnd = lambda k, shape, s: jax.random.normal(k, shape, jnp.float32) * s
    D, L, E = INPUT_DIM, INPUT_LEN, ENCODE_DIM
    return {
        # encoder
        'ew1': rnd(ks[0], (16, D, 1), 0.3),   'eb1': rnd(ks[1], (16,), 0.1),
        'ew2': rnd(ks[2], (8, 16, 1), 0.2),   'eb2': rnd(ks[3], (8,), 0.1),
        'ew3': rnd(ks[4], (4, 8, 3), 0.2),    'eb3': rnd(ks[5], (4,), 0.1),
        'ew4': rnd(ks[6], (E * L, 4 * L), 0.1), 'eb4': rnd(ks[7], (E * L,), 0.1),
        # decoder
        'dw1': rnd(ks[8], (4, E, 3), 0.3),    'db1': rnd(ks[9], (4,), 0.1),
        'dw2': rnd(ks[10], (8, 4, 3), 0.2),   'db2': rnd(ks[11], (8,), 0.1),
        'dw3': rnd(ks[12], (16, 8, 1), 0.2),  'db3': rnd(ks[13], (16,), 0.1),
        'dw4': rnd(ks[14], (D, 16, 1), 0.2),  'db4': rnd(ks[15], (D,), 0.1),
    }


# ---------------------------------------------------------------------------
# pure-JAX reference (correctness check only)
# ---------------------------------------------------------------------------
def _ref_conv1d(x, w, b):
    # x: (B, Cin, L), w: (Cout, Cin, K); cross-correlation, pad = (K-1)//2
    K = w.shape[-1]
    pad = (K - 1) // 2
    L = x.shape[-1]
    xp = jnp.pad(x, ((0, 0), (0, 0), (pad, pad)))
    y = sum(jnp.einsum('oi,bil->bol', w[:, :, k], xp[:, :, k:k + L]) for k in range(K))
    return y + b[None, :, None]


def reference_forward(x, p):
    B = x.shape[0]
    h = jax.nn.relu(_ref_conv1d(x, p['ew1'], p['eb1']))
    h = jax.nn.relu(_ref_conv1d(h, p['ew2'], p['eb2']))
    h = jax.nn.relu(_ref_conv1d(h, p['ew3'], p['eb3']))
    hf = h.reshape(B, 4 * INPUT_LEN)                     # torch .view(-1, 4*L)
    z = hf @ p['ew4'].T + p['eb4']
    z = z.reshape(B, ENCODE_DIM, INPUT_LEN)              # torch .view(-1, E, L)
    d = jax.nn.relu(_ref_conv1d(z, p['dw1'], p['db1']))
    d = jax.nn.relu(_ref_conv1d(d, p['dw2'], p['db2']))
    d = jax.nn.relu(_ref_conv1d(d, p['dw3'], p['db3']))
    d = _ref_conv1d(d, p['dw4'], p['db4'])
    return d


# ---------------------------------------------------------------------------
if __name__ == "__main__":
    key = jax.random.PRNGKey(0)
    pkey, xkey = jax.random.split(key)
    params = init_params(pkey)
    x = jax.random.normal(xkey, (BATCH, INPUT_DIM, INPUT_LEN), jnp.float32)

    slab, layout = pack_params(params)
    forward = make_forward(layout)

    out = jax.block_until_ready(forward(x, slab))
    ref = jax.block_until_ready(reference_forward(x, params))

    assert out.shape == (BATCH, INPUT_DIM, INPUT_LEN), out.shape
    max_err = float(jnp.max(jnp.abs(out - ref)))
    assert max_err < 1e-4, f"max abs err = {max_err}"
    print("KERNEL_OK")
</pallas_src>

<mosaic_0001>
module attributes {stable_mosaic.version = 11 : i64} {
  func.func @_autoencoder_kernel(%arg0: memref<4x32xf32, #tpu.memory_space<vmem>>, %arg1: memref<232x32xf32, #tpu.memory_space<vmem>>, %arg2: memref<4x32xf32, #tpu.memory_space<vmem>>) attributes {dimension_semantics = [], scalar_prefetch = 0 : i64, scratch_operands = 0 : i64, tpu.core_type = #tpu.core_type<tc>} {
    %c0 = arith.constant 0 : index
    %c0_0 = arith.constant 0 : index
    %0 = vector.load %arg1[%c0, %c0_0] : memref<232x32xf32, #tpu.memory_space<vmem>>, vector<1x32xf32>
    %c8 = arith.constant 8 : index
    %c0_1 = arith.constant 0 : index
    %1 = vector.load %arg1[%c8, %c0_1] : memref<232x32xf32, #tpu.memory_space<vmem>>, vector<1x32xf32>
    %c0_2 = arith.constant 0 : index
    %c0_3 = arith.constant 0 : index
    %2 = vector.load %arg0[%c0_2, %c0_3] : memref<4x32xf32, #tpu.memory_space<vmem>>, vector<4x32xf32>
    %c16 = arith.constant 16 : index
    %c0_4 = arith.constant 0 : index
    %3 = vector.load %arg1[%c16, %c0_4] : memref<232x32xf32, #tpu.memory_space<vmem>>, vector<16x4xf32>
    %c32 = arith.constant 32 : index
    %c0_5 = arith.constant 0 : index
    %4 = vector.load %arg1[%c32, %c0_5] : memref<232x32xf32, #tpu.memory_space<vmem>>, vector<16x1xf32>
    %cst = arith.constant dense<0.000000e+00> : vector<16x32xf32>
    %5 = tpu.matmul %3, %2, %cst {dimension_numbers = #tpu.dot_dimension_numbers<[1], [0], [0], [1], [0, 0, 1, 1], [], []>} : vector<16x4xf32>, vector<4x32xf32>, vector<16x32xf32> -> vector<16x32xf32>
    %6 = vector.broadcast %4 : vector<16x1xf32> to vector<16x32xf32>
    %7 = arith.addf %5, %6 : vector<16x32xf32>
    %cst_6 = arith.constant 0.000000e+00 : f32
    %8 = vector.broadcast %cst_6 : f32 to vector<16x32xf32>
    %9 = arith.maximumf %7, %8 : vector<16x32xf32>
    %c48 = arith.constant 48 : index
    %c0_7 = arith.constant 0 : index
    %10 = vector.load %arg1[%c48, %c0_7] : memref<232x32xf32, #tpu.memory_space<vmem>>, vector<8x16xf32>
    %c56 = arith.constant 56 : index
    %c0_8 = arith.constant 0 : index
    %11 = vector.load %arg1[%c56, %c0_8] : memref<232x32xf32, #tpu.memory_space<vmem>>, vector<8x1xf32>
    %cst_9 = arith.constant dense<0.000000e+00> : vector<8x32xf32>
    %12 = tpu.matmul %10, %9, %cst_9 {dimension_numbers = #tpu.dot_dimension_numbers<[1], [0], [0], [1], [0, 0, 1, 1], [], []>} : vector<8x16xf32>, vector<16x32xf32>, vector<8x32xf32> -> vector<8x32xf32>
    %13 = vector.broadcast %11 : vector<8x1xf32> to vector<8x32xf32>
    %14 = arith.addf %12, %13 : vector<8x32xf32>
    %cst_10 = arith.constant 0.000000e+00 : f32
    %15 = vector.broadcast %cst_10 : f32 to vector<8x32xf32>
    %16 = arith.maximumf %14, %15 : vector<8x32xf32>
    %c64 = arith.constant 64 : index
    %c0_11 = arith.constant 0 : index
    %17 = vector.load %arg1[%c64, %c0_11] : memref<232x32xf32, #tpu.memory_space<vmem>>, vector<4x24xf32>
    %c72 = arith.constant 72 : index
    %c0_12 = arith.constant 0 : index
    %18 = vector.load %arg1[%c72, %c0_12] : memref<232x32xf32, #tpu.memory_space<vmem>>, vector<4x1xf32>
    %19 = vector.extract_strided_slice %16 {offsets = [0, 31], sizes = [8, 1], strides = [1, 1]} : vector<8x32xf32> to vector<8x1xf32>
    %20 = vector.extract_strided_slice %16 {offsets = [0, 0], sizes = [8, 31], strides = [1, 1]} : vector<8x32xf32> to vector<8x31xf32>
    %21 = tpu.concatenate %19, %20 in 1 : vector<8x1xf32>, vector<8x31xf32> -> vector<8x32xf32>
    %22 = vector.broadcast %0 : vector<1x32xf32> to vector<8x32xf32>
    %23 = arith.mulf %21, %22 : vector<8x32xf32>
    %24 = vector.extract_strided_slice %16 {offsets = [0, 1], sizes = [8, 31], strides = [1, 1]} : vector<8x32xf32> to vector<8x31xf32>
    %25 = vector.extract_strided_slice %16 {offsets = [0, 0], sizes = [8, 1], strides = [1, 1]} : vector<8x32xf32> to vector<8x1xf32>
    %26 = tpu.concatenate %24, %25 in 1 : vector<8x31xf32>, vector<8x1xf32> -> vector<8x32xf32>
    %27 = vector.broadcast %1 : vector<1x32xf32> to vector<8x32xf32>
    %28 = arith.mulf %26, %27 : vector<8x32xf32>
    %29 = tpu.concatenate %23, %16, %28 in 0 : vector<8x32xf32>, vector<8x32xf32>, vector<8x32xf32> -> vector<24x32xf32>
    %cst_13 = arith.constant dense<0.000000e+00> : vector<4x32xf32>
    %30 = tpu.matmul %17, %29, %cst_13 {dimension_numbers = #tpu.dot_dimension_numbers<[1], [0], [0], [1], [0, 0, 1, 1], [], []>} : vector<4x24xf32>, vector<24x32xf32>, vector<4x32xf32> -> vector<4x32xf32>
    %31 = vector.broadcast %18 : vector<4x1xf32> to vector<4x32xf32>
    %32 = arith.addf %30, %31 : vector<4x32xf32>
    %cst_14 = arith.constant 0.000000e+00 : f32
    %33 = vector.broadcast %cst_14 : f32 to vector<4x32xf32>
    %34 = arith.maximumf %32, %33 : vector<4x32xf32>
    %35 = vector.extract_strided_slice %34 {offsets = [0, 0], sizes = [1, 16], strides = [1, 1]} : vector<4x32xf32> to vector<1x16xf32>
    %36 = vector.extract_strided_slice %34 {offsets = [1, 0], sizes = [1, 16], strides = [1, 1]} : vector<4x32xf32> to vector<1x16xf32>
    %37 = vector.extract_strided_slice %34 {offsets = [2, 0], sizes = [1, 16], strides = [1, 1]} : vector<4x32xf32> to vector<1x16xf32>
    %38 = vector.extract_strided_slice %34 {offsets = [3, 0], sizes = [1, 16], strides = [1, 1]} : vector<4x32xf32> to vector<1x16xf32>
    %39 = tpu.concatenate %35, %36, %37, %38 in 1 : vector<1x16xf32>, vector<1x16xf32>, vector<1x16xf32>, vector<1x16xf32> -> vector<1x64xf32>
    %40 = vector.extract_strided_slice %34 {offsets = [0, 16], sizes = [1, 16], strides = [1, 1]} : vector<4x32xf32> to vector<1x16xf32>
    %41 = vector.extract_strided_slice %34 {offsets = [1, 16], sizes = [1, 16], strides = [1, 1]} : vector<4x32xf32> to vector<1x16xf32>
    %42 = vector.extract_strided_slice %34 {offsets = [2, 16], sizes = [1, 16], strides = [1, 1]} : vector<4x32xf32> to vector<1x16xf32>
    %43 = vector.extract_strided_slice %34 {offsets = [3, 16], sizes = [1, 16], strides = [1, 1]} : vector<4x32xf32> to vector<1x16xf32>
    %44 = tpu.concatenate %40, %41, %42, %43 in 1 : vector<1x16xf32>, vector<1x16xf32>, vector<1x16xf32>, vector<1x16xf32> -> vector<1x64xf32>
    %45 = tpu.concatenate %39, %44 in 0 : vector<1x64xf32>, vector<1x64xf32> -> vector<2x64xf32>
    %c80 = arith.constant 80 : index
    %c0_15 = arith.constant 0 : index
    %46 = vector.load %arg1[%c80, %c0_15] : memref<232x32xf32, #tpu.memory_space<vmem>>, vector<64x32xf32>
    %cst_16 = arith.constant dense<0.000000e+00> : vector<2x32xf32>
    %47 = tpu.matmul %45, %46, %cst_16 {dimension_numbers = #tpu.dot_dimension_numbers<[1], [0], [0], [1], [0, 0, 1, 1], [], []>} : vector<2x64xf32>, vector<64x32xf32>, vector<2x32xf32> -> vector<2x32xf32>
    %c144 = arith.constant 144 : index
    %c0_17 = arith.constant 0 : index
    %48 = vector.load %arg1[%c144, %c0_17] : memref<232x32xf32, #tpu.memory_space<vmem>>, vector<1x32xf32>
    %49 = vector.broadcast %48 : vector<1x32xf32> to vector<2x32xf32>
    %50 = arith.addf %47, %49 : vector<2x32xf32>
    %51 = vector.extract_strided_slice %50 {offsets = [0, 0], sizes = [1, 16], strides = [1, 1]} : vector<2x32xf32> to vector<1x16xf32>
    %52 = vector.extract_strided_slice %50 {offsets = [1, 0], sizes = [1, 16], strides = [1, 1]} : vector<2x32xf32> to vector<1x16xf32>
    %53 = tpu.concatenate %51, %52 in 1 : vector<1x16xf32>, vector<1x16xf32> -> vector<1x32xf32>
    %54 = vector.extract_strided_slice %50 {offsets = [0, 16], sizes = [1, 16], strides = [1, 1]} : vector<2x32xf32> to vector<1x16xf32>
    %55 = vector.extract_strided_slice %50 {offsets = [1, 16], sizes = [1, 16], strides = [1, 1]} : vector<2x32xf32> to vector<1x16xf32>
    %56 = tpu.concatenate %54, %55 in 1 : vector<1x16xf32>, vector<1x16xf32> -> vector<1x32xf32>
    %57 = tpu.concatenate %53, %56 in 0 : vector<1x32xf32>, vector<1x32xf32> -> vector<2x32xf32>
    %c152 = arith.constant 152 : index
    %c0_18 = arith.constant 0 : index
    %58 = vector.load %arg1[%c152, %c0_18] : memref<232x32xf32, #tpu.memory_space<vmem>>, vector<4x6xf32>
    %c160 = arith.constant 160 : index
    %c0_19 = arith.constant 0 : index
    %59 = vector.load %arg1[%c160, %c0_19] : memref<232x32xf32, #tpu.memory_space<vmem>>, vector<4x1xf32>
    %60 = vector.extract_strided_slice %57 {offsets = [0, 31], sizes = [2, 1], strides = [1, 1]} : vector<2x32xf32> to vector<2x1xf32>
    %61 = vector.extract_strided_slice %57 {offsets = [0, 0], sizes = [2, 31], strides = [1, 1]} : vector<2x32xf32> to vector<2x31xf32>
    %62 = tpu.concatenate %60, %61 in 1 : vector<2x1xf32>, vector<2x31xf32> -> vector<2x32xf32>
    %63 = vector.broadcast %0 : vector<1x32xf32> to vector<2x32xf32>
    %64 = arith.mulf %62, %63 : vector<2x32xf32>
    %65 = vector.extract_strided_slice %57 {offsets = [0, 1], sizes = [2, 31], strides = [1, 1]} : vector<2x32xf32> to vector<2x31xf32>
    %66 = vector.extract_strided_slice %57 {offsets = [0, 0], sizes = [2, 1], strides = [1, 1]} : vector<2x32xf32> to vector<2x1xf32>
    %67 = tpu.concatenate %65, %66 in 1 : vector<2x31xf32>, vector<2x1xf32> -> vector<2x32xf32>
    %68 = vector.broadcast %1 : vector<1x32xf32> to vector<2x32xf32>
    %69 = arith.mulf %67, %68 : vector<2x32xf32>
    %70 = tpu.concatenate %64, %57, %69 in 0 : vector<2x32xf32>, vector<2x32xf32>, vector<2x32xf32> -> vector<6x32xf32>
    %cst_20 = arith.constant dense<0.000000e+00> : vector<4x32xf32>
    %71 = tpu.matmul %58, %70, %cst_20 {dimension_numbers = #tpu.dot_dimension_numbers<[1], [0], [0], [1], [0, 0, 1, 1], [], []>} : vector<4x6xf32>, vector<6x32xf32>, vector<4x32xf32> -> vector<4x32xf32>
    %72 = vector.broadcast %59 : vector<4x1xf32> to vector<4x32xf32>
    %73 = arith.addf %71, %72 : vector<4x32xf32>
    %cst_21 = arith.constant 0.000000e+00 : f32
    %74 = vector.broadcast %cst_21 : f32 to vector<4x32xf32>
    %75 = arith.maximumf %73, %74 : vector<4x32xf32>
    %c168 = arith.constant 168 : index
    %c0_22 = arith.constant 0 : index
    %76 = vector.load %arg1[%c168, %c0_22] : memref<232x32xf32, #tpu.memory_space<vmem>>, vector<8x12xf32>
    %c176 = arith.constant 176 : index
    %c0_23 = arith.constant 0 : index
    %77 = vector.load %arg1[%c176, %c0_23] : memref<232x32xf32, #tpu.memory_space<vmem>>, vector<8x1xf32>
    %78 = vector.extract_strided_slice %75 {offsets = [0, 31], sizes = [4, 1], strides = [1, 1]} : vector<4x32xf32> to vector<4x1xf32>
    %79 = vector.extract_strided_slice %75 {offsets = [0, 0], sizes = [4, 31], strides = [1, 1]} : vector<4x32xf32> to vector<4x31xf32>
    %80 = tpu.concatenate %78, %79 in 1 : vector<4x1xf32>, vector<4x31xf32> -> vector<4x32xf32>
    %81 = vector.broadcast %0 : vector<1x32xf32> to vector<4x32xf32>
    %82 = arith.mulf %80, %81 : vector<4x32xf32>
    %83 = vector.extract_strided_slice %75 {offsets = [0, 1], sizes = [4, 31], strides = [1, 1]} : vector<4x32xf32> to vector<4x31xf32>
    %84 = vector.extract_strided_slice %75 {offsets = [0, 0], sizes = [4, 1], strides = [1, 1]} : vector<4x32xf32> to vector<4x1xf32>
    %85 = tpu.concatenate %83, %84 in 1 : vector<4x31xf32>, vector<4x1xf32> -> vector<4x32xf32>
    %86 = vector.broadcast %1 : vector<1x32xf32> to vector<4x32xf32>
    %87 = arith.mulf %85, %86 : vector<4x32xf32>
    %88 = tpu.concatenate %82, %75, %87 in 0 : vector<4x32xf32>, vector<4x32xf32>, vector<4x32xf32> -> vector<12x32xf32>
    %cst_24 = arith.constant dense<0.000000e+00> : vector<8x32xf32>
    %89 = tpu.matmul %76, %88, %cst_24 {dimension_numbers = #tpu.dot_dimension_numbers<[1], [0], [0], [1], [0, 0, 1, 1], [], []>} : vector<8x12xf32>, vector<12x32xf32>, vector<8x32xf32> -> vector<8x32xf32>
    %90 = vector.broadcast %77 : vector<8x1xf32> to vector<8x32xf32>
    %91 = arith.addf %89, %90 : vector<8x32xf32>
    %cst_25 = arith.constant 0.000000e+00 : f32
    %92 = vector.broadcast %cst_25 : f32 to vector<8x32xf32>
    %93 = arith.maximumf %91, %92 : vector<8x32xf32>
    %c184 = arith.constant 184 : index
    %c0_26 = arith.constant 0 : index
    %94 = vector.load %arg1[%c184, %c0_26] : memref<232x32xf32, #tpu.memory_space<vmem>>, vector<16x8xf32>
    %c200 = arith.constant 200 : index
    %c0_27 = arith.constant 0 : index
    %95 = vector.load %arg1[%c200, %c0_27] : memref<232x32xf32, #tpu.memory_space<vmem>>, vector<16x1xf32>
    %cst_28 = arith.constant dense<0.000000e+00> : vector<16x32xf32>
    %96 = tpu.matmul %94, %93, %cst_28 {dimension_numbers = #tpu.dot_dimension_numbers<[1], [0], [0], [1], [0, 0, 1, 1], [], []>} : vector<16x8xf32>, vector<8x32xf32>, vector<16x32xf32> -> vector<16x32xf32>
    %97 = vector.broadcast %95 : vector<16x1xf32> to vector<16x32xf32>
    %98 = arith.addf %96, %97 : vector<16x32xf32>
    %cst_29 = arith.constant 0.000000e+00 : f32
    %99 = vector.broadcast %cst_29 : f32 to vector<16x32xf32>
    %100 = arith.maximumf %98, %99 : vector<16x32xf32>
    %c216 = arith.constant 216 : index
    %c0_30 = arith.constant 0 : index
    %101 = vector.load %arg1[%c216, %c0_30] : memref<232x32xf32, #tpu.memory_space<vmem>>, vector<4x16xf32>
    %c224 = arith.constant 224 : index
    %c0_31 = arith.constant 0 : index
    %102 = vector.load %arg1[%c224, %c0_31] : memref<232x32xf32, #tpu.memory_space<vmem>>, vector<4x1xf32>
    %cst_32 = arith.constant dense<0.000000e+00> : vector<4x32xf32>
    %103 = tpu.matmul %101, %100, %cst_32 {dimension_numbers = #tpu.dot_dimension_numbers<[1], [0], [0], [1], [0, 0, 1, 1], [], []>} : vector<4x16xf32>, vector<16x32xf32>, vector<4x32xf32> -> vector<4x32xf32>
    %104 = vector.broadcast %102 : vector<4x1xf32> to vector<4x32xf32>
    %105 = arith.addf %103, %104 : vector<4x32xf32>
    %c0_33 = arith.constant 0 : index
    %c0_34 = arith.constant 0 : index
    %106 = vector.load %arg2[%c0_33, %c0_34] : memref<4x32xf32, #tpu.memory_space<vmem>>, vector<4x32xf32>
    tpu.vector_store %arg2[%c0_33, %c0_34], %105 {strides = array<i32>} : memref<4x32xf32, #tpu.memory_space<vmem>>, vector<4x32xf32>,
    return
  }
}

</mosaic_0001>

<llo_original>
// kernel: forward.1
$region0: #{forward.1}
  #allocation0 [shape = 'u32[]', space=smem, size = 0x4, offset = 0x4, fixed_abs, tag = 'smem constant byte address 0x4 - core index']
  #allocation1 [shape = 'u32[144,128]{1,0:T(1,128)}', space=vmem, size = 0x12000, scoped, tag = 'internal scratch']
  %s0 = inlined_call_operand.vmem [shape: f32[4,32], index: 0, kind: input, shape index: {}]
  %s1 = inlined_call_operand.vmem [shape: f32[232,32], index: 1, kind: input, shape index: {}]
  %s2 = inlined_call_operand.vmem [shape: f32[4,32], index: 2, kind: output, shape index: {}]
  %s3 = sld [smem:[#allocation0]]
  $region18: #{forward.1} parent=0
    _
  %s5 = ssub.s32 1, %s3
  %s6 = scalar_select 0, %s5, %s3
  // Predicated region
  $region2: #{forward.1} parent=0 // pred_check
    _
  $region3: #{forward.1} parent=0 // pred_check_branch
    %8 = sbr.rel (0) target = $region5
  $region4: #{forward.1} parent=0 // pred_region
    _
  $region5: #{forward.1} parent=0 // pred_fallthru
    _
  // Predicated region
  $region6: #{forward.1} parent=0 // pred_check
    _
  $region7: #{forward.1} parent=0 // pred_check_branch
    %10 = sbr.rel (0) target = $region9
  $region8: #{forward.1} parent=0 // pred_region
    _
  $region9: #{forward.1} parent=0 // pred_fallthru
    _
  %v11 = vld [vmem:[%s1] sm:$0x1]
  %v12 = vld [vmem:[%s1 + $0x8] sm:$0x1]
  %v13 = vld [vmem:[%s0] sm:$0xf]
  %v14 = vld [vmem:[%s1 + $0x10] sm:$0xff]
  %v15 = vld [vmem:[%s1 + $0x18] sm:$0xff]
  %v16 = vld [vmem:[%s1 + $0x20] sm:$0xff]
  %v17 = vld [vmem:[%s1 + $0x28] sm:$0xff]
  %19 = vset.pattern.permute.xlu0 0
  %20 = vperm.xlu0 %19, %v16
  %v21 = vpop.permute.xlu0 %20
  %24 = vset.pattern.permute.xlu0 0
  %25 = vperm.xlu0 %24, %v17
  %v26 = vpop.permute.xlu0 %25
  %vm28 = vcmask 31744
  %v30 = vsel %vm28, %v14, 0
  %v33 = vsel %vm28, %v15, 0
  %vm35 = vcmask 1043456
  %v37 = vsel %vm35, %v13, 0
  %39 = vmatprep.subr.mxu0 0.0
  %40 = vmatpush1.msra.mxu0 0.0
  %41 = vmatprep.subr.mxu0 0.0
  %42 = vmatpush1.msra.mxu0 0.0
  %43 = vmatprep.subr.mxu0 0.0
  %44 = vmatpush1.msra.mxu0 0.0
  %45 = vmatprep.subr.mxu0 0.0
  %46 = vmatpush1.msra.mxu0 0.0
  %47 = vmatprep.subr.mxu0 0.0
  %48 = vmatpush1.msra.mxu0 0.0
  %49 = vmatprep.subr.mxu0 0.0
  %50 = vmatpush1.msra.mxu0 0.0
  %51 = vmatprep.subr.mxu0 0.0
  %52 = vmatpush1.msra.mxu0 0.0
  %53 = vmatprep.subr.mxu0 0.0
  %54 = vmatpush1.msra.mxu0 0.0
  %55 = vmatprep.subr.mxu0 0.0
  %56 = vmatpush1.msra.mxu0 0.0
  %57 = vmatprep.subr.mxu0 0.0
  %58 = vmatpush1.msra.mxu0 0.0
  %59 = vmatprep.subr.mxu0 0.0
  %60 = vmatpush1.msra.mxu0 0.0
  %61 = vmatprep.subr.mxu0 0.0
  %62 = vmatpush1.msra.mxu0 0.0
  %63 = vmatprep.subr.mxu0 0.0
  %64 = vmatpush1.msra.mxu0 0.0
  %65 = vmatprep.subr.mxu0 0.0
  %66 = vmatpush1.msra.mxu0 0.0
  %67 = vmatprep.subr.mxu0 0.0
  %68 = vmatpush1.msra.mxu0 0.0
  %69 = vmatprep.subr.mxu0 0.0
  %70 = vmatpush1.msra.mxu0 %v37
  %71 = vmatprep.subr.mxu0 0.0
  %72 = vmatpush2.msra.mxu0 0.0
  %73 = vmatprep.subr.mxu0 0.0
  %74 = vmatpush2.msra.mxu0 0.0
  %75 = vmatprep.subr.mxu0 0.0
  %76 = vmatpush2.msra.mxu0 0.0
  %77 = vmatprep.subr.mxu0 0.0
  %78 = vmatpush2.msra.mxu0 0.0
  %79 = vmatprep.subr.mxu0 0.0
  %80 = vmatpush2.msra.mxu0 0.0
  %81 = vmatprep.subr.mxu0 0.0
  %82 = vmatpush2.msra.mxu0 0.0
  %83 = vmatprep.subr.mxu0 0.0
  %84 = vmatpush2.msra.mxu0 0.0
  %85 = vmatprep.subr.mxu0 0.0
  %86 = vmatpush2.msra.mxu0 0.0
  %87 = vmatprep.subr.mxu0 0.0
  %88 = vmatpush2.msra.mxu0 0.0
  %89 = vmatprep.subr.mxu0 0.0
  %90 = vmatpush2.msra.mxu0 0.0
  %91 = vmatprep.subr.mxu0 0.0
  %92 = vmatpush2.msra.mxu0 0.0
  %93 = vmatprep.subr.mxu0 0.0
  %94 = vmatpush2.msra.mxu0 0.0
  %95 = vmatprep.subr.mxu0 0.0
  %96 = vmatpush2.msra.mxu0 0.0
  %97 = vmatprep.subr.mxu0 0.0
  %98 = vmatpush2.msra.mxu0 0.0
  %99 = vmatprep.subr.mxu0 0.0
  %100 = vmatpush2.msra.mxu0 0.0
  %101 = vmatprep.subr.mxu0 0.0
  %102 = vmatpush2.msra.mxu0 0.0
  %103 = vmatprep.mubr.f32.mxu0 0.0
  %104 = vmatmul.mubr.f32.gmra.mxu0 %v30
  %v105 = vpop.f32.mrf.mxu0
  %v106 = vadd.f32 %v21, %v105
  %v107 = vpop.f32.mrf.mxu0
  %108 = vmatprep.mubr.f32.mxu0 0.0
  %109 = vmatmul.mubr.f32.gmra.mxu0 %v33
  %v110 = vpop.f32.mrf.mxu0
  %v111 = vadd.f32 %v26, %v110
  %v112 = vpop.f32.mrf.mxu0
  %113 = vdwg.mxu0
  %v114 = vmax.f32 %v106, 0.0
  %v115 = vmax.f32 %v111, 0.0
  %v116 = vld [vmem:[%s1 + $0x30] sm:$0xff]
  %v117 = vld [vmem:[%s1 + $0x38] sm:$0xff]
  %119 = vset.pattern.permute.xlu0 0
  %120 = vperm.xlu0 %119, %v117
  %v121 = vpop.permute.xlu0 %120
  %vm123 = vcmask 130048
  %v125 = vsel %vm123, %v116, 0
  %127 = vmatprep.subr.mxu0 0.0
  %128 = vmatpush1.msra.mxu0 0.0
  %129 = vmatprep.subr.mxu0 0.0
  %130 = vmatpush1.msra.mxu0 0.0
  %131 = vmatprep.subr.mxu0 0.0
  %132 = vmatpush1.msra.mxu0 0.0
  %133 = vmatprep.subr.mxu0 0.0
  %134 = vmatpush1.msra.mxu0 0.0
  %135 = vmatprep.subr.mxu0 0.0
  %136 = vmatpush1.msra.mxu0 0.0
  %137 = vmatprep.subr.mxu0 0.0
  %138 = vmatpush1.msra.mxu0 0.0
  %139 = vmatprep.subr.mxu0 0.0
  %140 = vmatpush1.msra.mxu0 0.0
  %141 = vmatprep.subr.mxu0 0.0
  %142 = vmatpush1.msra.mxu0 0.0
  %143 = vmatprep.subr.mxu0 0.0
  %144 = vmatpush1.msra.mxu0 0.0
  %145 = vmatprep.subr.mxu0 0.0
  %146 = vmatpush1.msra.mxu0 0.0
  %147 = vmatprep.subr.mxu0 0.0
  %148 = vmatpush1.msra.mxu0 0.0
  %149 = vmatprep.subr.mxu0 0.0
  %150 = vmatpush1.msra.mxu0 0.0
  %151 = vmatprep.subr.mxu0 0.0
  %152 = vmatpush1.msra.mxu0 0.0
  %153 = vmatprep.subr.mxu0 0.0
  %154 = vmatpush1.msra.mxu0 0.0
  %155 = vmatprep.subr.mxu0 0.0
  %156 = vmatpush1.msra.mxu0 %v115
  %157 = vmatprep.subr.mxu0 0.0
  %158 = vmatpush1.msra.mxu0 %v114
  %159 = vmatprep.subr.mxu0 0.0
  %160 = vmatpush2.msra.mxu0 0.0
  %161 = vmatprep.subr.mxu0 0.0
  %162 = vmatpush2.msra.mxu0 0.0
  %163 = vmatprep.subr.mxu0 0.0
  %164 = vmatpush2.msra.mxu0 0.0
  %165 = vmatprep.subr.mxu0 0.0
  %166 = vmatpush2.msra.mxu0 0.0
  %167 = vmatprep.subr.mxu0 0.0
  %168 = vmatpush2.msra.mxu0 0.0
  %169 = vmatprep.subr.mxu0 0.0
  %170 = vmatpush2.msra.mxu0 0.0
  %171 = vmatprep.subr.mxu0 0.0
  %172 = vmatpush2.msra.mxu0 0.0
  %173 = vmatprep.subr.mxu0 0.0
  %174 = vmatpush2.msra.mxu0 0.0
  %175 = vmatprep.subr.mxu0 0.0
  %176 = vmatpush2.msra.mxu0 0.0
  %177 = vmatprep.subr.mxu0 0.0
  %178 = vmatpush2.msra.mxu0 0.0
  %179 = vmatprep.subr.mxu0 0.0
  %180 = vmatpush2.msra.mxu0 0.0
  %181 = vmatprep.subr.mxu0 0.0
  %182 = vmatpush2.msra.mxu0 0.0
  %183 = vmatprep.subr.mxu0 0.0
  %184 = vmatpush2.msra.mxu0 0.0
  %185 = vmatprep.subr.mxu0 0.0
  %186 = vmatpush2.msra.mxu0 0.0
  %187 = vmatprep.subr.mxu0 0.0
  %188 = vmatpush2.msra.mxu0 0.0
  %189 = vmatprep.subr.mxu0 0.0
  %190 = vmatpush2.msra.mxu0 0.0
  %191 = vmatprep.mubr.f32.mxu0 0.0
  %192 = vmatmul.mubr.f32.gmra.mxu0 %v125
  %v193 = vpop.f32.mrf.mxu0
  %v194 = vadd.f32 %v121, %v193
  %v195 = vpop.f32.mrf.mxu0
  %196 = vdwg.mxu0
  %v197 = vmax.f32 %v194, 0.0
  %v198 = vld [vmem:[%s1 + $0x40] sm:$0xf]
  %v199 = vld [vmem:[%s1 + $0x48] sm:$0xf]
  %201 = vrot.lane.b32.xlu0 %v197, 97
  %v202 = vpop.permute.xlu0 %201
  %204 = vrot.lane.b32.xlu0 %v197, 1
  %v205 = vpop.permute.xlu0 %204
  %vm207 = vcmask 7168
  %v208 = vsel %vm207, %v202, %v205
  %v209 = vlaneseq
  %v210 = vshrl.u32 %v209, 7
  %v211 = vsub.s32 0, %v210
  %v212 = vrot.slane %v11, %v211
  %v213 = vmul.f32 %v208, %v212
  %214 = vrot.lane.b32.xlu0 %v197, 127
  %v215 = vpop.permute.xlu0 %214
  %217 = vrot.lane.b32.xlu0 %v197, 31
  %v218 = vpop.permute.xlu0 %217
  %vm220 = vcmask 252928
  %v221 = vsel %vm220, %v215, %v218
  %v222 = vlaneseq
  %v223 = vshrl.u32 %v222, 7
  %v224 = vsub.s32 0, %v223
  %v225 = vrot.slane %v12, %v224
  %v226 = vmul.f32 %v221, %v225
  %228 = vset.pattern.permute.xlu0 0
  %229 = vperm.xlu0 %228, %v199
  %v230 = vpop.permute.xlu0 %229
  %vm232 = vcmask 195584
  %v234 = vsel %vm232, %v198, 0
  %236 = vmatprep.subr.mxu0 0.0
  %237 = vmatpush1.msra.mxu0 0.0
  %238 = vmatprep.subr.mxu0 0.0
  %239 = vmatpush1.msra.mxu0 0.0
  %240 = vmatprep.subr.mxu0 0.0
  %241 = vmatpush1.msra.mxu0 0.0
  %242 = vmatprep.subr.mxu0 0.0
  %243 = vmatpush1.msra.mxu0 0.0
  %244 = vmatprep.subr.mxu0 0.0
  %245 = vmatpush1.msra.mxu0 0.0
  %246 = vmatprep.subr.mxu0 0.0
  %247 = vmatpush1.msra.mxu0 0.0
  %248 = vmatprep.subr.mxu0 0.0
  %249 = vmatpush1.msra.mxu0 0.0
  %250 = vmatprep.subr.mxu0 0.0
  %251 = vmatpush1.msra.mxu0 0.0
  %252 = vmatprep.subr.mxu0 0.0
  %253 = vmatpush1.msra.mxu0 0.0
  %254 = vmatprep.subr.mxu0 0.0
  %255 = vmatpush1.msra.mxu0 0.0
  %256 = vmatprep.subr.mxu0 0.0
  %257 = vmatpush1.msra.mxu0 0.0
  %258 = vmatprep.subr.mxu0 0.0
  %259 = vmatpush1.msra.mxu0 0.0
  %260 = vmatprep.subr.mxu0 0.0
  %261 = vmatpush1.msra.mxu0 0.0
  %262 = vmatprep.subr.mxu0 0.0
  %263 = vmatpush1.msra.mxu0 %v226
  %264 = vmatprep.subr.mxu0 0.0
  %265 = vmatpush1.msra.mxu0 %v197
  %266 = vmatprep.subr.mxu0 0.0
  %267 = vmatpush1.msra.mxu0 %v213
  %268 = vmatprep.subr.mxu0 0.0
  %269 = vmatpush2.msra.mxu0 0.0
  %270 = vmatprep.subr.mxu0 0.0
  %271 = vmatpush2.msra.mxu0 0.0
  %272 = vmatprep.subr.mxu0 0.0
  %273 = vmatpush2.msra.mxu0 0.0
  %274 = vmatprep.subr.mxu0 0.0
  %275 = vmatpush2.msra.mxu0 0.0
  %276 = vmatprep.subr.mxu0 0.0
  %277 = vmatpush2.msra.mxu0 0.0
  %278 = vmatprep.subr.mxu0 0.0
  %279 = vmatpush2.msra.mxu0 0.0
  %280 = vmatprep.subr.mxu0 0.0
  %281 = vmatpush2.msra.mxu0 0.0
  %282 = vmatprep.subr.mxu0 0.0
  %283 = vmatpush2.msra.mxu0 0.0
  %284 = vmatprep.subr.mxu0 0.0
  %285 = vmatpush2.msra.mxu0 0.0
  %286 = vmatprep.subr.mxu0 0.0
  %287 = vmatpush2.msra.mxu0 0.0
  %288 = vmatprep.subr.mxu0 0.0
  %289 = vmatpush2.msra.mxu0 0.0
  %290 = vmatprep.subr.mxu0 0.0
  %291 = vmatpush2.msra.mxu0 0.0
  %292 = vmatprep.subr.mxu0 0.0
  %293 = vmatpush2.msra.mxu0 0.0
  %294 = vmatprep.subr.mxu0 0.0
  %295 = vmatpush2.msra.mxu0 0.0
  %296 = vmatprep.subr.mxu0 0.0
  %297 = vmatpush2.msra.mxu0 0.0
  %298 = vmatprep.subr.mxu0 0.0
  %299 = vmatpush2.msra.mxu0 0.0
  %300 = vmatprep.mubr.f32.mxu0 0.0
  %301 = vmatmul.mubr.f32.gmra.mxu0 %v234
  %v302 = vpop.f32.mrf.mxu0
  %v303 = vadd.f32 %v230, %v302
  %v304 = vpop.f32.mrf.mxu0
  %305 = vdwg.mxu0
  %v306 = vmax.f32 %v303, 0.0
  %v308 = vrot.slane %v306, 1
  %309 = vrot.lane.b32.xlu0 %v308, 16
  %v310 = vpop.permute.xlu0 %309
  %v312 = vrot.slane %v306, 2
  %313 = vrot.lane.b32.xlu0 %v312, 32
  %v314 = vpop.permute.xlu0 %313
  %v316 = vrot.slane %v306, 3
  %317 = vrot.lane.b32.xlu0 %v316, 48
  %v318 = vpop.permute.xlu0 %317
  %v320 = vsel %vm123, %v306, %v310
  %vm321 = vcmask 261120
  %v322 = vsel %vm321, %v320, %v314
  %vm323 = vcmask 392192
  %v324 = vsel %vm323, %v322, %v318
  %325 = vrot.lane.b32.xlu0 %v306, 112
  %v326 = vpop.permute.xlu0 %325
  %329 = vrot.lane.b32.xlu0 %v312, 16
  %v330 = vpop.permute.xlu0 %329
  %332 = vrot.lane.b32.xlu0 %v316, 32
  %v333 = vpop.permute.xlu0 %332
  %v335 = vsel %vm123, %v326, %v308
  %v336 = vsel %vm321, %v335, %v330
  %v337 = vsel %vm323, %v336, %v333
  %v339 = vrot.slane %v337, 7
  %vm341 = vcmask 1040384
  %v342 = vsel %vm341, %v324, %v339
  %v343 = vld [vmem:[%s1 + $0x50] sm:$0xff]
  %v344 = vld [vmem:[%s1 + $0x58] sm:$0xff]
  %v345 = vld [vmem:[%s1 + $0x60] sm:$0xff]
  %v346 = vld [vmem:[%s1 + $0x68] sm:$0xff]
  %v347 = vld [vmem:[%s1 + $0x70] sm:$0xff]
  %v348 = vld [vmem:[%s1 + $0x78] sm:$0xff]
  %v349 = vld [vmem:[%s1 + $0x80] sm:$0xff]
  %v350 = vld [vmem:[%s1 + $0x88] sm:$0xff]
  %v351 = vld [vmem:[%s1 + $0x90] sm:$0x1]
  %v352 = vlaneseq
  %v353 = vshrl.u32 %v352, 7
  %v354 = vsub.s32 0, %v353
  %v355 = vrot.slane %v351, %v354
  %vm356 = vcmask 523264
  %v358 = vsel %vm356, %v342, 0
  %360 = vmatprep.subr.mxu0 0.0
  %361 = vmatpush1.msra.mxu0 0.0
  %362 = vmatprep.subr.mxu0 0.0
  %363 = vmatpush1.msra.mxu0 0.0
  %364 = vmatprep.subr.mxu0 0.0
  %365 = vmatpush1.msra.mxu0 0.0
  %366 = vmatprep.subr.mxu0 0.0
  %367 = vmatpush1.msra.mxu0 0.0
  %368 = vmatprep.subr.mxu0 0.0
  %369 = vmatpush1.msra.mxu0 0.0
  %370 = vmatprep.subr.mxu0 0.0
  %371 = vmatpush1.msra.mxu0 0.0
  %372 = vmatprep.subr.mxu0 0.0
  %373 = vmatpush1.msra.mxu0 0.0
  %374 = vmatprep.subr.mxu0 0.0
  %375 = vmatpush1.msra.mxu0 0.0
  %376 = vmatprep.subr.mxu0 0.0
  %377 = vmatpush1.msra.mxu0 %v350
  %378 = vmatprep.subr.mxu0 0.0
  %379 = vmatpush1.msra.mxu0 %v349
  %380 = vmatprep.subr.mxu0 0.0
  %381 = vmatpush1.msra.mxu0 %v348
  %382 = vmatprep.subr.mxu0 0.0
  %383 = vmatpush1.msra.mxu0 %v347
  %384 = vmatprep.subr.mxu0 0.0
  %385 = vmatpush1.msra.mxu0 %v346
  %386 = vmatprep.subr.mxu0 0.0
  %387 = vmatpush1.msra.mxu0 %v345
  %388 = vmatprep.subr.mxu0 0.0
  %389 = vmatpush1.msra.mxu0 %v344
  %390 = vmatprep.subr.mxu0 0.0
  %391 = vmatpush1.msra.mxu0 %v343
  %392 = vmatprep.subr.mxu0 0.0
  %393 = vmatpush2.msra.mxu0 0.0
  %394 = vmatprep.subr.mxu0 0.0
  %395 = vmatpush2.msra.mxu0 0.0
  %396 = vmatprep.subr.mxu0 0.0
  %397 = vmatpush2.msra.mxu0 0.0
  %398 = vmatprep.subr.mxu0 0.0
  %399 = vmatpush2.msra.mxu0 0.0
  %400 = vmatprep.subr.mxu0 0.0
  %401 = vmatpush2.msra.mxu0 0.0
  %402 = vmatprep.subr.mxu0 0.0
  %403 = vmatpush2.msra.mxu0 0.0
  %404 = vmatprep.subr.mxu0 0.0
  %405 = vmatpush2.msra.mxu0 0.0
  %406 = vmatprep.subr.mxu0 0.0
  %407 = vmatpush2.msra.mxu0 0.0
  %408 = vmatprep.subr.mxu0 0.0
  %409 = vmatpush2.msra.mxu0 0.0
  %410 = vmatprep.subr.mxu0 0.0
  %411 = vmatpush2.msra.mxu0 0.0
  %412 = vmatprep.subr.mxu0 0.0
  %413 = vmatpush2.msra.mxu0 0.0
  %414 = vmatprep.subr.mxu0 0.0
  %415 = vmatpush2.msra.mxu0 0.0
  %416 = vmatprep.subr.mxu0 0.0
  %417 = vmatpush2.msra.mxu0 0.0
  %418 = vmatprep.subr.mxu0 0.0
  %419 = vmatpush2.msra.mxu0 0.0
  %420 = vmatprep.subr.mxu0 0.0
  %421 = vmatpush2.msra.mxu0 0.0
  %422 = vmatprep.subr.mxu0 0.0
  %423 = vmatpush2.msra.mxu0 0.0
  %424 = vmatprep.mubr.f32.mxu0 0.0
  %425 = vmatmul.mubr.f32.gmra.mxu0 %v358
  %v426 = vpop.f32.mrf.mxu0
  %v427 = vadd.f32 %v355, %v426
  %v428 = vpop.f32.mrf.mxu0
  %429 = vdwg.mxu0
  %v431 = vrot.slane %v427, 1
  %432 = vrot.lane.b32.xlu0 %v431, 16
  %v433 = vpop.permute.xlu0 %432
  %v435 = vsel %vm123, %v427, %v433
  %436 = vrot.lane.b32.xlu0 %v427, 112
  %v437 = vpop.permute.xlu0 %436
  %v440 = vsel %vm123, %v437, %v431
  %v442 = vrot.slane %v440, 7
  %v444 = vsel %vm341, %v435, %v442
  %v445 = vld [vmem:[%s1 + $0x98] sm:$0xf]
  %v446 = vld [vmem:[%s1 + $0xa0] sm:$0xf]
  %448 = vrot.lane.b32.xlu0 %v444, 97
  %v449 = vpop.permute.xlu0 %448
  %451 = vrot.lane.b32.xlu0 %v444, 1
  %v452 = vpop.permute.xlu0 %451
  %v454 = vsel %vm207, %v449, %v452
  %v455 = vmul.f32 %v454, %v212
  %456 = vrot.lane.b32.xlu0 %v444, 127
  %v457 = vpop.permute.xlu0 %456
  %459 = vrot.lane.b32.xlu0 %v444, 31
  %v460 = vpop.permute.xlu0 %459
  %v462 = vsel %vm220, %v457, %v460
  %v463 = vmul.f32 %v462, %v225
  %v464 = vrot.slane %v444, 6
  %v467 = vrot.slane %v463, 4
  %vm469 = vcmask 1041408
  %v470 = vsel %vm469, %v455, %v464
  %v471 = vsel %vm35, %v470, %v467
  %473 = vset.pattern.permute.xlu0 0
  %474 = vperm.xlu0 %473, %v446
  %v475 = vpop.permute.xlu0 %474
  %vm477 = vcmask 48128
  %v479 = vsel %vm477, %v445, 0
  %vm481 = vcmask 1045504
  %v483 = vsel %vm481, %v471, 0
  %485 = vmatprep.subr.mxu0 0.0
  %486 = vmatpush1.msra.mxu0 0.0
  %487 = vmatprep.subr.mxu0 0.0
  %488 = vmatpush1.msra.mxu0 0.0
  %489 = vmatprep.subr.mxu0 0.0
  %490 = vmatpush1.msra.mxu0 0.0
  %491 = vmatprep.subr.mxu0 0.0
  %492 = vmatpush1.msra.mxu0 0.0
  %493 = vmatprep.subr.mxu0 0.0
  %494 = vmatpush1.msra.mxu0 0.0
  %495 = vmatprep.subr.mxu0 0.0
  %496 = vmatpush1.msra.mxu0 0.0
  %497 = vmatprep.subr.mxu0 0.0
  %498 = vmatpush1.msra.mxu0 0.0
  %499 = vmatprep.subr.mxu0 0.0
  %500 = vmatpush1.msra.mxu0 0.0
  %501 = vmatprep.subr.mxu0 0.0
  %502 = vmatpush1.msra.mxu0 0.0
  %503 = vmatprep.subr.mxu0 0.0
  %504 = vmatpush1.msra.mxu0 0.0
  %505 = vmatprep.subr.mxu0 0.0
  %506 = vmatpush1.msra.mxu0 0.0
  %507 = vmatprep.subr.mxu0 0.0
  %508 = vmatpush1.msra.mxu0 0.0
  %509 = vmatprep.subr.mxu0 0.0
  %510 = vmatpush1.msra.mxu0 0.0
  %511 = vmatprep.subr.mxu0 0.0
  %512 = vmatpush1.msra.mxu0 0.0
  %513 = vmatprep.subr.mxu0 0.0
  %514 = vmatpush1.msra.mxu0 0.0
  %515 = vmatprep.subr.mxu0 0.0
  %516 = vmatpush1.msra.mxu0 %v483
  %517 = vmatprep.subr.mxu0 0.0
  %518 = vmatpush2.msra.mxu0 0.0
  %519 = vmatprep.subr.mxu0 0.0
  %520 = vmatpush2.msra.mxu0 0.0
  %521 = vmatprep.subr.mxu0 0.0
  %522 = vmatpush2.msra.mxu0 0.0
  %523 = vmatprep.subr.mxu0 0.0
  %524 = vmatpush2.msra.mxu0 0.0
  %525 = vmatprep.subr.mxu0 0.0
  %526 = vmatpush2.msra.mxu0 0.0
  %527 = vmatprep.subr.mxu0 0.0
  %528 = vmatpush2.msra.mxu0 0.0
  %529 = vmatprep.subr.mxu0 0.0
  %530 = vmatpush2.msra.mxu0 0.0
  %531 = vmatprep.subr.mxu0 0.0
  %532 = vmatpush2.msra.mxu0 0.0
  %533 = vmatprep.subr.mxu0 0.0
  %534 = vmatpush2.msra.mxu0 0.0
  %535 = vmatprep.subr.mxu0 0.0
  %536 = vmatpush2.msra.mxu0 0.0
  %537 = vmatprep.subr.mxu0 0.0
  %538 = vmatpush2.msra.mxu0 0.0
  %539 = vmatprep.subr.mxu0 0.0
  %540 = vmatpush2.msra.mxu0 0.0
  %541 = vmatprep.subr.mxu0 0.0
  %542 = vmatpush2.msra.mxu0 0.0
  %543 = vmatprep.subr.mxu0 0.0
  %544 = vmatpush2.msra.mxu0 0.0
  %545 = vmatprep.subr.mxu0 0.0
  %546 = vmatpush2.msra.mxu0 0.0
  %547 = vmatprep.subr.mxu0 0.0
  %548 = vmatpush2.msra.mxu0 0.0
  %549 = vmatprep.mubr.f32.mxu0 0.0
  %550 = vmatmul.mubr.f32.gmra.mxu0 %v479
  %v551 = vpop.f32.mrf.mxu0
  %v552 = vadd.f32 %v475, %v551
  %v553 = vpop.f32.mrf.mxu0
  %554 = vdwg.mxu0
  %v555 = vmax.f32 %v552, 0.0
  %v556 = vld [vmem:[%s1 + $0xa8] sm:$0xff]
  %v557 = vld [vmem:[%s1 + $0xb0] sm:$0xff]
  %559 = vrot.lane.b32.xlu0 %v555, 97
  %v560 = vpop.permute.xlu0 %559
  %562 = vrot.lane.b32.xlu0 %v555, 1
  %v563 = vpop.permute.xlu0 %562
  %v565 = vsel %vm207, %v560, %v563
  %v566 = vmul.f32 %v565, %v212
  %567 = vrot.lane.b32.xlu0 %v555, 127
  %v568 = vpop.permute.xlu0 %567
  %570 = vrot.lane.b32.xlu0 %v555, 31
  %v571 = vpop.permute.xlu0 %570
  %v573 = vsel %vm220, %v568, %v571
  %v574 = vmul.f32 %v573, %v225
  %v575 = vrot.slane %v555, 4
  %v577 = vsel %vm35, %v566, %v575
  %579 = vset.pattern.permute.xlu0 0
  %580 = vperm.xlu0 %579, %v557
  %v581 = vpop.permute.xlu0 %580
  %vm583 = vcmask 97280
  %v585 = vsel %vm583, %v556, 0
  %v588 = vsel %vm35, %v574, 0
  %590 = vmatprep.subr.mxu0 0.0
  %591 = vmatpush1.msra.mxu0 0.0
  %592 = vmatprep.subr.mxu0 0.0
  %593 = vmatpush1.msra.mxu0 0.0
  %594 = vmatprep.subr.mxu0 0.0
  %595 = vmatpush1.msra.mxu0 0.0
  %596 = vmatprep.subr.mxu0 0.0
  %597 = vmatpush1.msra.mxu0 0.0
  %598 = vmatprep.subr.mxu0 0.0
  %599 = vmatpush1.msra.mxu0 0.0
  %600 = vmatprep.subr.mxu0 0.0
  %601 = vmatpush1.msra.mxu0 0.0
  %602 = vmatprep.subr.mxu0 0.0
  %603 = vmatpush1.msra.mxu0 0.0
  %604 = vmatprep.subr.mxu0 0.0
  %605 = vmatpush1.msra.mxu0 0.0
  %606 = vmatprep.subr.mxu0 0.0
  %607 = vmatpush1.msra.mxu0 0.0
  %608 = vmatprep.subr.mxu0 0.0
  %609 = vmatpush1.msra.mxu0 0.0
  %610 = vmatprep.subr.mxu0 0.0
  %611 = vmatpush1.msra.mxu0 0.0
  %612 = vmatprep.subr.mxu0 0.0
  %613 = vmatpush1.msra.mxu0 0.0
  %614 = vmatprep.subr.mxu0 0.0
  %615 = vmatpush1.msra.mxu0 0.0
  %616 = vmatprep.subr.mxu0 0.0
  %617 = vmatpush1.msra.mxu0 0.0
  %618 = vmatprep.subr.mxu0 0.0
  %619 = vmatpush1.msra.mxu0 %v588
  %620 = vmatprep.subr.mxu0 0.0
  %621 = vmatpush1.msra.mxu0 %v577
  %622 = vmatprep.subr.mxu0 0.0
  %623 = vmatpush2.msra.mxu0 0.0
  %624 = vmatprep.subr.mxu0 0.0
  %625 = vmatpush2.msra.mxu0 0.0
  %626 = vmatprep.subr.mxu0 0.0
  %627 = vmatpush2.msra.mxu0 0.0
  %628 = vmatprep.subr.mxu0 0.0
  %629 = vmatpush2.msra.mxu0 0.0
  %630 = vmatprep.subr.mxu0 0.0
  %631 = vmatpush2.msra.mxu0 0.0
  %632 = vmatprep.subr.mxu0 0.0
  %633 = vmatpush2.msra.mxu0 0.0
  %634 = vmatprep.subr.mxu0 0.0
  %635 = vmatpush2.msra.mxu0 0.0
  %636 = vmatprep.subr.mxu0 0.0
  %637 = vmatpush2.msra.mxu0 0.0
  %638 = vmatprep.subr.mxu0 0.0
  %639 = vmatpush2.msra.mxu0 0.0
  %640 = vmatprep.subr.mxu0 0.0
  %641 = vmatpush2.msra.mxu0 0.0
  %642 = vmatprep.subr.mxu0 0.0
  %643 = vmatpush2.msra.mxu0 0.0
  %644 = vmatprep.subr.mxu0 0.0
  %645 = vmatpush2.msra.mxu0 0.0
  %646 = vmatprep.subr.mxu0 0.0
  %647 = vmatpush2.msra.mxu0 0.0
  %648 = vmatprep.subr.mxu0 0.0
  %649 = vmatpush2.msra.mxu0 0.0
  %650 = vmatprep.subr.mxu0 0.0
  %651 = vmatpush2.msra.mxu0 0.0
  %652 = vmatprep.subr.mxu0 0.0
  %653 = vmatpush2.msra.mxu0 0.0
  %654 = vmatprep.mubr.f32.mxu0 0.0
  %655 = vmatmul.mubr.f32.gmra.mxu0 %v585
  %v656 = vpop.f32.mrf.mxu0
  %v657 = vadd.f32 %v581, %v656
  %v658 = vpop.f32.mrf.mxu0
  %659 = vdwg.mxu0
  %v660 = vmax.f32 %v657, 0.0
  %v661 = vld [vmem:[%s1 + $0xb8] sm:$0xff]
  %v662 = vld [vmem:[%s1 + $0xc0] sm:$0xff]
  %v663 = vld [vmem:[%s1 + $0xc8] sm:$0xff]
  %v664 = vld [vmem:[%s1 + $0xd0] sm:$0xff]
  %666 = vset.pattern.permute.xlu0 0
  %667 = vperm.xlu0 %666, %v663
  %v668 = vpop.permute.xlu0 %667
  %671 = vset.pattern.permute.xlu0 0
  %672 = vperm.xlu0 %671, %v664
  %v673 = vpop.permute.xlu0 %672
  %vm675 = vcmask 64512
  %v677 = vsel %vm675, %v661, 0
  %v680 = vsel %vm675, %v662, 0
  %682 = vmatprep.subr.mxu0 0.0
  %683 = vmatpush1.msra.mxu0 0.0
  %684 = vmatprep.subr.mxu0 0.0
  %685 = vmatpush1.msra.mxu0 0.0
  %686 = vmatprep.subr.mxu0 0.0
  %687 = vmatpush1.msra.mxu0 0.0
  %688 = vmatprep.subr.mxu0 0.0
  %689 = vmatpush1.msra.mxu0 0.0
  %690 = vmatprep.subr.mxu0 0.0
  %691 = vmatpush1.msra.mxu0 0.0
  %692 = vmatprep.subr.mxu0 0.0
  %693 = vmatpush1.msra.mxu0 0.0
  %694 = vmatprep.subr.mxu0 0.0
  %695 = vmatpush1.msra.mxu0 0.0
  %696 = vmatprep.subr.mxu0 0.0
  %697 = vmatpush1.msra.mxu0 0.0
  %698 = vmatprep.subr.mxu0 0.0
  %699 = vmatpush1.msra.mxu0 0.0
  %700 = vmatprep.subr.mxu0 0.0
  %701 = vmatpush1.msra.mxu0 0.0
  %702 = vmatprep.subr.mxu0 0.0
  %703 = vmatpush1.msra.mxu0 0.0
  %704 = vmatprep.subr.mxu0 0.0
  %705 = vmatpush1.msra.mxu0 0.0
  %706 = vmatprep.subr.mxu0 0.0
  %707 = vmatpush1.msra.mxu0 0.0
  %708 = vmatprep.subr.mxu0 0.0
  %709 = vmatpush1.msra.mxu0 0.0
  %710 = vmatprep.subr.mxu0 0.0
  %711 = vmatpush1.msra.mxu0 0.0
  %712 = vmatprep.subr.mxu0 0.0
  %713 = vmatpush1.msra.mxu0 %v660
  %714 = vmatprep.subr.mxu0 0.0
  %715 = vmatpush2.msra.mxu0 0.0
  %716 = vmatprep.subr.mxu0 0.0
  %717 = vmatpush2.msra.mxu0 0.0
  %718 = vmatprep.subr.mxu0 0.0
  %719 = vmatpush2.msra.mxu0 0.0
  %720 = vmatprep.subr.mxu0 0.0
  %721 = vmatpush2.msra.mxu0 0.0
  %722 = vmatprep.subr.mxu0 0.0
  %723 = vmatpush2.msra.mxu0 0.0
  %724 = vmatprep.subr.mxu0 0.0
  %725 = vmatpush2.msra.mxu0 0.0
  %726 = vmatprep.subr.mxu0 0.0
  %727 = vmatpush2.msra.mxu0 0.0
  %728 = vmatprep.subr.mxu0 0.0
  %729 = vmatpush2.msra.mxu0 0.0
  %730 = vmatprep.subr.mxu0 0.0
  %731 = vmatpush2.msra.mxu0 0.0
  %732 = vmatprep.subr.mxu0 0.0
  %733 = vmatpush2.msra.mxu0 0.0
  %734 = vmatprep.subr.mxu0 0.0
  %735 = vmatpush2.msra.mxu0 0.0
  %736 = vmatprep.subr.mxu0 0.0
  %737 = vmatpush2.msra.mxu0 0.0
  %738 = vmatprep.subr.mxu0 0.0
  %739 = vmatpush2.msra.mxu0 0.0
  %740 = vmatprep.subr.mxu0 0.0
  %741 = vmatpush2.msra.mxu0 0.0
  %742 = vmatprep.subr.mxu0 0.0
  %743 = vmatpush2.msra.mxu0 0.0
  %744 = vmatprep.subr.mxu0 0.0
  %745 = vmatpush2.msra.mxu0 0.0
  %746 = vmatprep.mubr.f32.mxu0 0.0
  %747 = vmatmul.mubr.f32.gmra.mxu0 %v677
  %v748 = vpop.f32.mrf.mxu0
  %v749 = vadd.f32 %v668, %v748
  %v750 = vpop.f32.mrf.mxu0
  %751 = vmatprep.mubr.f32.mxu0 0.0
  %752 = vmatmul.mubr.f32.gmra.mxu0 %v680
  %v753 = vpop.f32.mrf.mxu0
  %v754 = vadd.f32 %v673, %v753
  %v755 = vpop.f32.mrf.mxu0
  %756 = vdwg.mxu0
  %v757 = vmax.f32 %v749, 0.0
  %v758 = vmax.f32 %v754, 0.0
  %v759 = vld [vmem:[%s1 + $0xd8] sm:$0xf]
  %v760 = vld [vmem:[%s1 + $0xe0] sm:$0xf]
  %762 = vset.pattern.permute.xlu0 0
  %763 = vperm.xlu0 %762, %v760
  %v764 = vpop.permute.xlu0 %763
  %v767 = vsel %vm123, %v759, 0
  %769 = vmatprep.subr.mxu0 0.0
  %770 = vmatpush1.msra.mxu0 0.0
  %771 = vmatprep.subr.mxu0 0.0
  %772 = vmatpush1.msra.mxu0 0.0
  %773 = vmatprep.subr.mxu0 0.0
  %774 = vmatpush1.msra.mxu0 0.0
  %775 = vmatprep.subr.mxu0 0.0
  %776 = vmatpush1.msra.mxu0 0.0
  %777 = vmatprep.subr.mxu0 0.0
  %778 = vmatpush1.msra.mxu0 0.0
  %779 = vmatprep.subr.mxu0 0.0
  %780 = vmatpush1.msra.mxu0 0.0
  %781 = vmatprep.subr.mxu0 0.0
  %782 = vmatpush1.msra.mxu0 0.0
  %783 = vmatprep.subr.mxu0 0.0
  %784 = vmatpush1.msra.mxu0 0.0
  %785 = vmatprep.subr.mxu0 0.0
  %786 = vmatpush1.msra.mxu0 0.0
  %787 = vmatprep.subr.mxu0 0.0
  %788 = vmatpush1.msra.mxu0 0.0
  %789 = vmatprep.subr.mxu0 0.0
  %790 = vmatpush1.msra.mxu0 0.0
  %791 = vmatprep.subr.mxu0 0.0
  %792 = vmatpush1.msra.mxu0 0.0
  %793 = vmatprep.subr.mxu0 0.0
  %794 = vmatpush1.msra.mxu0 0.0
  %795 = vmatprep.subr.mxu0 0.0
  %796 = vmatpush1.msra.mxu0 0.0
  %797 = vmatprep.subr.mxu0 0.0
  %798 = vmatpush1.msra.mxu0 %v758
  %799 = vmatprep.subr.mxu0 0.0
  %800 = vmatpush1.msra.mxu0 %v757
  %801 = vmatprep.subr.mxu0 0.0
  %802 = vmatpush2.msra.mxu0 0.0
  %803 = vmatprep.subr.mxu0 0.0
  %804 = vmatpush2.msra.mxu0 0.0
  %805 = vmatprep.subr.mxu0 0.0
  %806 = vmatpush2.msra.mxu0 0.0
  %807 = vmatprep.subr.mxu0 0.0
  %808 = vmatpush2.msra.mxu0 0.0
  %809 = vmatprep.subr.mxu0 0.0
  %810 = vmatpush2.msra.mxu0 0.0
  %811 = vmatprep.subr.mxu0 0.0
  %812 = vmatpush2.msra.mxu0 0.0
  %813 = vmatprep.subr.mxu0 0.0
  %814 = vmatpush2.msra.mxu0 0.0
  %815 = vmatprep.subr.mxu0 0.0
  %816 = vmatpush2.msra.mxu0 0.0
  %817 = vmatprep.subr.mxu0 0.0
  %818 = vmatpush2.msra.mxu0 0.0
  %819 = vmatprep.subr.mxu0 0.0
  %820 = vmatpush2.msra.mxu0 0.0
  %821 = vmatprep.subr.mxu0 0.0
  %822 = vmatpush2.msra.mxu0 0.0
  %823 = vmatprep.subr.mxu0 0.0
  %824 = vmatpush2.msra.mxu0 0.0
  %825 = vmatprep.subr.mxu0 0.0
  %826 = vmatpush2.msra.mxu0 0.0
  %827 = vmatprep.subr.mxu0 0.0
  %828 = vmatpush2.msra.mxu0 0.0
  %829 = vmatprep.subr.mxu0 0.0
  %830 = vmatpush2.msra.mxu0 0.0
  %831 = vmatprep.subr.mxu0 0.0
  %832 = vmatpush2.msra.mxu0 0.0
  %833 = vmatprep.mubr.f32.mxu0 0.0
  %834 = vmatmul.mubr.f32.gmra.mxu0 %v767
  %v835 = vpop.f32.mrf.mxu0
  %v836 = vadd.f32 %v764, %v835
  %v837 = vpop.f32.mrf.mxu0
  %838 = vdwg.mxu0
  %vm839 = vcmask 257024
  %840 = vst.msk [vmem:[%s2] sm:$0xf] %vm839, %v836
  // Predicated region
  $region10: #{forward.1} parent=0 // pred_check
    _
  $region11: #{forward.1} parent=0 // pred_check_branch
    %842 = sbr.rel (0) target = $region13
  $region12: #{forward.1} parent=0 // pred_region
    _
  $region13: #{forward.1} parent=0 // pred_fallthru
    _
  // Predicated region
  $region14: #{forward.1} parent=0 // pred_check
    _
  $region15: #{forward.1} parent=0 // pred_check_branch
    %844 = sbr.rel (0) target = $region17
  $region16: #{forward.1} parent=0 // pred_region
    _
  $region17: #{forward.1} parent=0 // pred_fallthru
    _

</llo_original>
